<compile_context>
chip_gen: v7x
topology: tpu7x:2x2x1
jax: 0.10.0
libtpu: 0.0.40
codegen_flags: <defaults>
</compile_context>

<pallas_src>
import functools

import jax
import jax.numpy as jnp
from jax.experimental import pallas as pl
from jax.experimental.pallas import tpu as pltpu

EPS = 1e-5
LANE = 128


# ----------------------------- Pallas kernel ------------------------------- #

def _bn_of_relu(h, gamma, beta):
    """BatchNorm1d(relu(h)), batch statistics, biased variance.  All f32.

    Fused epilogue: the two cross-sublane reductions (mean, mean of squares)
    issue back-to-back on the XLU, then a single FMA applies scale/shift.
    """
    h = jnp.maximum(h, 0.0)
    mean = jnp.mean(h, axis=0, keepdims=True)
    var = jnp.maximum(jnp.mean(h * h, axis=0, keepdims=True) - mean * mean, 0.0)
    scale = gamma * jax.lax.rsqrt(var + EPS)
    shift = beta - scale * mean
    return h * scale + shift


def _fused_gcn_kernel(n_conv, n_hidden, *refs):
    """Whole network in one kernel; every operand is resident in VMEM.

    refs = (a_norm[bf16], x[bf16], pool[bf16],
            [w(bf16), b, gamma, beta] * n_conv,
            [w(bf16), b, gamma, beta] * n_hidden,
            w_final_row[f32], b_final[f32],
            out)
    """
    a = refs[0][...]          # (N, N)   bf16
    h = refs[1][...]          # (N, Dp)  bf16
    pool = refs[2][...]       # (G, N)   bf16
    o_ref = refs[-1]

    i = 3
    # ---- conv stack: h = BN(relu(A_norm @ h @ W + b)) ----------------------
    for _ in range(n_conv):
        w = refs[i][...]          # bf16 (Fin_p, Fout_p)
        b = refs[i + 1][...]      # f32  (1, Fout_p)
        g = refs[i + 2][...]
        bt = refs[i + 3][...]
        i += 4
        ah = jnp.dot(a, h, preferred_element_type=jnp.float32)        # (A @ X)
        z = jnp.dot(ah.astype(jnp.bfloat16), w,
                    preferred_element_type=jnp.float32) + b
        h = _bn_of_relu(z, g, bt).astype(jnp.bfloat16)

    # ---- global_add_pool: one-hot pooling matrix @ node features ----------
    h = jnp.dot(pool, h, preferred_element_type=jnp.float32)          # (G, Dp) f32

    # ---- hidden MLP: h = BN(relu(h @ W + b)) -------------------------------
    for _ in range(n_hidden):
        w = refs[i][...]
        b = refs[i + 1][...]
        g = refs[i + 2][...]
        bt = refs[i + 3][...]
        i += 4
        z = jnp.dot(h.astype(jnp.bfloat16), w,
                    preferred_element_type=jnp.float32) + b
        h = _bn_of_relu(z, g, bt)

    # ---- final head: VPU multiply + XLU lane reduction (no 1-wide MXU op) --
    wf = refs[i][...]             # f32 (1, Dp)  (padded entries are zero)
    bf = refs[i + 1][...]         # f32 (1, 1)
    o_ref[...] = jnp.sum(h * wf, axis=-1, keepdims=True) + bf


# ------------------------------ JAX glue ----------------------------------- #

def _round_up(x, m):
    return ((x + m - 1) // m) * m


def _pad_to(a, shape):
    return jnp.pad(a, [(0, t - s) for s, t in zip(a.shape, shape)])


def precompute_graph(edge_index, batch, num_nodes, num_graphs):
    """Dense D^-1/2 (A + I) D^-1/2 (torch_geometric gcn_norm) and pool matrix.

    Precomputed ONCE (only depends on edge_index / batch), so the dense
    scatter never sits on the per-forward critical path.
    """
    # TODO(synk): for real graphs replace the dense scatter + dense A with an
    # in-kernel SpMM using scalar-prefetched edge/offset tables
    # (PrefetchScalarGridSpec) and segment sums; same for the one-hot pool.
    src = edge_index[0]
    dst = edge_index[1]
    a = jnp.zeros((num_nodes, num_nodes), jnp.float32)
    a = a.at[dst, src].add(1.0)                       # message src -> dst
    a = a + jnp.eye(num_nodes, dtype=jnp.float32)     # add self loops
    deg = jnp.sum(a, axis=1)                          # degree incl. self loop
    dinv = jnp.where(deg > 0, jax.lax.rsqrt(deg), 0.0)
    a_norm = (dinv[:, None] * a * dinv[None, :]).astype(jnp.bfloat16)

    pool = (batch[None, :] == jnp.arange(num_graphs)[:, None]).astype(jnp.bfloat16)
    return a_norm, pool


def init_params(key, in_dim, n_conv, conv_dim, n_hidden, hidden_dim):
    """Parameters zero-padded so every feature dim is a multiple of 128."""
    dc_p = _round_up(conv_dim, LANE)
    dh_p = _round_up(hidden_dim, LANE)

    params = {"convs": [], "linears": []}
    for i in range(n_conv):
        fin = in_dim if i == 0 else conv_dim
        fin_p = _round_up(fin, LANE)
        key, k1, k2 = jax.random.split(key, 3)
        w = jax.random.normal(k1, (fin, conv_dim), jnp.float32) / jnp.sqrt(float(fin))
        b = 0.1 * jax.random.normal(k2, (1, conv_dim), jnp.float32)
        params["convs"].append((
            _pad_to(w, (fin_p, dc_p)).astype(jnp.bfloat16),
            _pad_to(b, (1, dc_p)),
            _pad_to(jnp.ones((1, conv_dim), jnp.float32), (1, dc_p)),
            jnp.zeros((1, dc_p), jnp.float32),
        ))
    for i in range(n_hidden):
        fin = conv_dim if i == 0 else hidden_dim
        fin_p = _round_up(fin, LANE)
        key, k1, k2 = jax.random.split(key, 3)
        w = jax.random.normal(k1, (fin, hidden_dim), jnp.float32) / jnp.sqrt(float(fin))
        b = 0.1 * jax.random.normal(k2, (1, hidden_dim), jnp.float32)
        params["linears"].append((
            _pad_to(w, (fin_p, dh_p)).astype(jnp.bfloat16),
            _pad_to(b, (1, dh_p)),
            _pad_to(jnp.ones((1, hidden_dim), jnp.float32), (1, dh_p)),
            jnp.zeros((1, dh_p), jnp.float32),
        ))
    key, k1, k2 = jax.random.split(key, 3)
    wf = jax.random.normal(k1, (hidden_dim, 1), jnp.float32) / jnp.sqrt(float(hidden_dim))
    bf = 0.1 * jax.random.normal(k2, (1, 1), jnp.float32)
    params["final"] = (_pad_to(wf.T, (1, dh_p)), bf)   # stored as a lane row
    return params


@jax.jit
def gcn_forward(params, a_norm, x_pad, pool):
    n_conv = len(params["convs"])
    n_hidden = len(params["linears"])
    num_graphs = pool.shape[0]
    n = x_pad.shape[0]
    dp = x_pad.shape[1]

    inputs = [a_norm, x_pad, pool]
    for layer in params["convs"]:
        inputs.extend(layer)
    for layer in params["linears"]:
        inputs.extend(layer)
    inputs.extend(params["final"])

    out_bytes = num_graphs * 1 * 4
    footprint = sum(int(a.size) * a.dtype.itemsize for a in inputs) + out_bytes

    # Advisory cost so XLA can overlap the custom call with surrounding work.
    flops = 0
    for w, _, _, _ in params["convs"]:
        flops += 2 * n * n * w.shape[0] + 2 * n * w.shape[0] * w.shape[1]
    flops += 2 * num_graphs * n * dp
    for w, _, _, _ in params["linears"]:
        flops += 2 * num_graphs * w.shape[0] * w.shape[1]
    flops += 2 * num_graphs * dp
    cost = pl.CostEstimate(flops=flops,
                           transcendentals=(n_conv + n_hidden) * dp,
                           bytes_accessed=footprint)

    kernel = functools.partial(_fused_gcn_kernel, n_conv, n_hidden)
    vmem_spec = pl.BlockSpec(memory_space=pltpu.MemorySpace.VMEM)

    # Single gridless pallas_call: whole arrays in VMEM, no pipelining.
    # TODO(synk): for real-size graphs (N >~ 3-4k on v7x's 64 MiB VMEM) tile
    # A_norm as (tile_n, N) row blocks (tile_n multiple of 8), mark that axis
    # "parallel" (v7x megacore) and the BN-reduction axis "arbitrary", with
    # BN-stat accumulate/finalize via pl.when -- unnecessary at KB-scale.
    return pl.pallas_call(
        kernel,
        out_shape=jax.ShapeDtypeStruct((num_graphs, 1), jnp.float32),
        in_specs=[vmem_spec] * len(inputs),
        out_specs=vmem_spec,
        compiler_params=pltpu.CompilerParams(
            vmem_limit_bytes=int(min(128 * 1024 * 1024,
                                     max(4 * footprint, 8 * 1024 * 1024)))),
        cost_estimate=cost,
    )(*inputs)


# --------------------------------- main ------------------------------------ #

if __name__ == "__main__":
    key = jax.random.PRNGKey(0)

    # small, deterministic synthetic graph batch
    num_nodes = 16
    num_graphs = 4
    num_edges = 40
    in_dim = 8
    n_convolutions = 2
    convolutions_dim = 32
    n_hidden_layers = 2
    hidden_layers_dim = 32

    key, kx, ke, kp = jax.random.split(key, 4)
    x = jax.random.normal(kx, (num_nodes, in_dim), jnp.float32)
    edge_index = jax.random.randint(ke, (2, num_edges), 0, num_nodes, jnp.int32)
    batch = jnp.repeat(jnp.arange(num_graphs, dtype=jnp.int32),
                       num_nodes // num_graphs)

    params = init_params(kp, in_dim, n_convolutions, convolutions_dim,
                         n_hidden_layers, hidden_layers_dim)

    # Graph-structure tensors are precomputed once (cached across forwards).
    a_norm, pool = precompute_graph(edge_index, batch, num_nodes, num_graphs)

    # Lane-pad node features to 128 and cast the MXU operand to bf16.
    x_pad = _pad_to(x, (num_nodes, _round_up(in_dim, LANE))).astype(jnp.bfloat16)

    out = gcn_forward(params, a_norm, x_pad, pool)
    out = jax.block_until_ready(out)
    assert out.shape == (num_graphs, 1)
    print("KERNEL_OK")
</pallas_src>

<mosaic_0001>
module attributes {stable_mosaic.version = 11 : i64} {
  func.func @_fused_gcn_kernel(%arg0: memref<16x16xbf16, #tpu.memory_space<vmem>>, %arg1: memref<16x128xbf16, #tpu.memory_space<vmem>>, %arg2: memref<4x16xbf16, #tpu.memory_space<vmem>>, %arg3: memref<128x128xbf16, #tpu.memory_space<vmem>>, %arg4: memref<1x128xf32, #tpu.memory_space<vmem>>, %arg5: memref<1x128xf32, #tpu.memory_space<vmem>>, %arg6: memref<1x128xf32, #tpu.memory_space<vmem>>, %arg7: memref<128x128xbf16, #tpu.memory_space<vmem>>, %arg8: memref<1x128xf32, #tpu.memory_space<vmem>>, %arg9: memref<1x128xf32, #tpu.memory_space<vmem>>, %arg10: memref<1x128xf32, #tpu.memory_space<vmem>>, %arg11: memref<128x128xbf16, #tpu.memory_space<vmem>>, %arg12: memref<1x128xf32, #tpu.memory_space<vmem>>, %arg13: memref<1x128xf32, #tpu.memory_space<vmem>>, %arg14: memref<1x128xf32, #tpu.memory_space<vmem>>, %arg15: memref<128x128xbf16, #tpu.memory_space<vmem>>, %arg16: memref<1x128xf32, #tpu.memory_space<vmem>>, %arg17: memref<1x128xf32, #tpu.memory_space<vmem>>, %arg18: memref<1x128xf32, #tpu.memory_space<vmem>>, %arg19: memref<1x128xf32, #tpu.memory_space<vmem>>, %arg20: memref<1x1xf32, #tpu.memory_space<vmem>>, %arg21: memref<4x1xf32, #tpu.memory_space<vmem>>) attributes {dimension_semantics = [], scalar_prefetch = 0 : i64, scratch_operands = 0 : i64, tpu.core_type = #tpu.core_type<tc>} {
    %c0 = arith.constant 0 : index
    %c0_0 = arith.constant 0 : index
    %0 = vector.load %arg0[%c0, %c0_0] : memref<16x16xbf16, #tpu.memory_space<vmem>>, vector<16x16xbf16>
    %c0_1 = arith.constant 0 : index
    %c0_2 = arith.constant 0 : index
    %1 = vector.load %arg1[%c0_1, %c0_2] : memref<16x128xbf16, #tpu.memory_space<vmem>>, vector<16x128xbf16>
    %c0_3 = arith.constant 0 : index
    %c0_4 = arith.constant 0 : index
    %2 = vector.load %arg2[%c0_3, %c0_4] : memref<4x16xbf16, #tpu.memory_space<vmem>>, vector<4x16xbf16>
    %c0_5 = arith.constant 0 : index
    %c0_6 = arith.constant 0 : index
    %3 = vector.load %arg3[%c0_5, %c0_6] : memref<128x128xbf16, #tpu.memory_space<vmem>>, vector<128x128xbf16>
    %c0_7 = arith.constant 0 : index
    %c0_8 = arith.constant 0 : index
    %4 = vector.load %arg4[%c0_7, %c0_8] : memref<1x128xf32, #tpu.memory_space<vmem>>, vector<1x128xf32>
    %c0_9 = arith.constant 0 : index
    %c0_10 = arith.constant 0 : index
    %5 = vector.load %arg5[%c0_9, %c0_10] : memref<1x128xf32, #tpu.memory_space<vmem>>, vector<1x128xf32>
    %c0_11 = arith.constant 0 : index
    %c0_12 = arith.constant 0 : index
    %6 = vector.load %arg6[%c0_11, %c0_12] : memref<1x128xf32, #tpu.memory_space<vmem>>, vector<1x128xf32>
    %cst = arith.constant dense<0.000000e+00> : vector<16x128xf32>
    %7 = tpu.matmul %0, %1, %cst {dimension_numbers = #tpu.dot_dimension_numbers<[1], [0], [0], [1], [0, 0, 1, 1], [], []>} : vector<16x16xbf16>, vector<16x128xbf16>, vector<16x128xf32> -> vector<16x128xf32>
    %8 = arith.truncf %7 : vector<16x128xf32> to vector<16x128xbf16>
    %cst_13 = arith.constant dense<0.000000e+00> : vector<16x128xf32>
    %9 = tpu.matmul %8, %3, %cst_13 {dimension_numbers = #tpu.dot_dimension_numbers<[1], [0], [0], [1], [0, 0, 1, 1], [], []>} : vector<16x128xbf16>, vector<128x128xbf16>, vector<16x128xf32> -> vector<16x128xf32>
    %10 = vector.broadcast %4 : vector<1x128xf32> to vector<16x128xf32>
    %11 = arith.addf %9, %10 : vector<16x128xf32>
    %cst_14 = arith.constant 0.000000e+00 : f32
    %12 = vector.broadcast %cst_14 : f32 to vector<16x128xf32>
    %13 = arith.maximumf %11, %12 : vector<16x128xf32>
    %cst_15 = arith.constant dense<0.000000e+00> : vector<128xf32>
    %14 = vector.multi_reduction <add>, %13, %cst_15 [0] : vector<16x128xf32> to vector<128xf32>
    %15 = vector.shape_cast %14 : vector<128xf32> to vector<1x128xf32>
    %cst_16 = arith.constant 1.600000e+01 : f32
    %16 = vector.broadcast %cst_16 : f32 to vector<1x128xf32>
    %17 = arith.divf %15, %16 : vector<1x128xf32>
    %18 = arith.mulf %13, %13 : vector<16x128xf32>
    %cst_17 = arith.constant dense<0.000000e+00> : vector<128xf32>
    %19 = vector.multi_reduction <add>, %18, %cst_17 [0] : vector<16x128xf32> to vector<128xf32>
    %20 = vector.shape_cast %19 : vector<128xf32> to vector<1x128xf32>
    %cst_18 = arith.constant 1.600000e+01 : f32
    %21 = vector.broadcast %cst_18 : f32 to vector<1x128xf32>
    %22 = arith.divf %20, %21 : vector<1x128xf32>
    %23 = arith.mulf %17, %17 : vector<1x128xf32>
    %24 = arith.subf %22, %23 : vector<1x128xf32>
    %cst_19 = arith.constant 0.000000e+00 : f32
    %25 = vector.broadcast %cst_19 : f32 to vector<1x128xf32>
    %26 = arith.maximumf %24, %25 : vector<1x128xf32>
    %cst_20 = arith.constant 9.99999974E-6 : f32
    %27 = vector.broadcast %cst_20 : f32 to vector<1x128xf32>
    %28 = arith.addf %26, %27 : vector<1x128xf32>
    %29 = math.rsqrt %28 : vector<1x128xf32>
    %30 = arith.mulf %5, %29 : vector<1x128xf32>
    %31 = arith.mulf %30, %17 : vector<1x128xf32>
    %32 = arith.subf %6, %31 : vector<1x128xf32>
    %33 = vector.broadcast %30 : vector<1x128xf32> to vector<16x128xf32>
    %34 = arith.mulf %13, %33 : vector<16x128xf32>
    %35 = vector.broadcast %32 : vector<1x128xf32> to vector<16x128xf32>
    %36 = arith.addf %34, %35 : vector<16x128xf32>
    %37 = arith.truncf %36 : vector<16x128xf32> to vector<16x128xbf16>
    %c0_21 = arith.constant 0 : index
    %c0_22 = arith.constant 0 : index
    %38 = vector.load %arg7[%c0_21, %c0_22] : memref<128x128xbf16, #tpu.memory_space<vmem>>, vector<128x128xbf16>
    %c0_23 = arith.constant 0 : index
    %c0_24 = arith.constant 0 : index
    %39 = vector.load %arg8[%c0_23, %c0_24] : memref<1x128xf32, #tpu.memory_space<vmem>>, vector<1x128xf32>
    %c0_25 = arith.constant 0 : index
    %c0_26 = arith.constant 0 : index
    %40 = vector.load %arg9[%c0_25, %c0_26] : memref<1x128xf32, #tpu.memory_space<vmem>>, vector<1x128xf32>
    %c0_27 = arith.constant 0 : index
    %c0_28 = arith.constant 0 : index
    %41 = vector.load %arg10[%c0_27, %c0_28] : memref<1x128xf32, #tpu.memory_space<vmem>>, vector<1x128xf32>
    %cst_29 = arith.constant dense<0.000000e+00> : vector<16x128xf32>
    %42 = tpu.matmul %0, %37, %cst_29 {dimension_numbers = #tpu.dot_dimension_numbers<[1], [0], [0], [1], [0, 0, 1, 1], [], []>} : vector<16x16xbf16>, vector<16x128xbf16>, vector<16x128xf32> -> vector<16x128xf32>
    %43 = arith.truncf %42 : vector<16x128xf32> to vector<16x128xbf16>
    %cst_30 = arith.constant dense<0.000000e+00> : vector<16x128xf32>
    %44 = tpu.matmul %43, %38, %cst_30 {dimension_numbers = #tpu.dot_dimension_numbers<[1], [0], [0], [1], [0, 0, 1, 1], [], []>} : vector<16x128xbf16>, vector<128x128xbf16>, vector<16x128xf32> -> vector<16x128xf32>
    %45 = vector.broadcast %39 : vector<1x128xf32> to vector<16x128xf32>
    %46 = arith.addf %44, %45 : vector<16x128xf32>
    %cst_31 = arith.constant 0.000000e+00 : f32
    %47 = vector.broadcast %cst_31 : f32 to vector<16x128xf32>
    %48 = arith.maximumf %46, %47 : vector<16x128xf32>
    %cst_32 = arith.constant dense<0.000000e+00> : vector<128xf32>
    %49 = vector.multi_reduction <add>, %48, %cst_32 [0] : vector<16x128xf32> to vector<128xf32>
    %50 = vector.shape_cast %49 : vector<128xf32> to vector<1x128xf32>
    %cst_33 = arith.constant 1.600000e+01 : f32
    %51 = vector.broadcast %cst_33 : f32 to vector<1x128xf32>
    %52 = arith.divf %50, %51 : vector<1x128xf32>
    %53 = arith.mulf %48, %48 : vector<16x128xf32>
    %cst_34 = arith.constant dense<0.000000e+00> : vector<128xf32>
    %54 = vector.multi_reduction <add>, %53, %cst_34 [0] : vector<16x128xf32> to vector<128xf32>
    %55 = vector.shape_cast %54 : vector<128xf32> to vector<1x128xf32>
    %cst_35 = arith.constant 1.600000e+01 : f32
    %56 = vector.broadcast %cst_35 : f32 to vector<1x128xf32>
    %57 = arith.divf %55, %56 : vector<1x128xf32>
    %58 = arith.mulf %52, %52 : vector<1x128xf32>
    %59 = arith.subf %57, %58 : vector<1x128xf32>
    %cst_36 = arith.constant 0.000000e+00 : f32
    %60 = vector.broadcast %cst_36 : f32 to vector<1x128xf32>
    %61 = arith.maximumf %59, %60 : vector<1x128xf32>
    %cst_37 = arith.constant 9.99999974E-6 : f32
    %62 = vector.broadcast %cst_37 : f32 to vector<1x128xf32>
    %63 = arith.addf %61, %62 : vector<1x128xf32>
    %64 = math.rsqrt %63 : vector<1x128xf32>
    %65 = arith.mulf %40, %64 : vector<1x128xf32>
    %66 = arith.mulf %65, %52 : vector<1x128xf32>
    %67 = arith.subf %41, %66 : vector<1x128xf32>
    %68 = vector.broadcast %65 : vector<1x128xf32> to vector<16x128xf32>
    %69 = arith.mulf %48, %68 : vector<16x128xf32>
    %70 = vector.broadcast %67 : vector<1x128xf32> to vector<16x128xf32>
    %71 = arith.addf %69, %70 : vector<16x128xf32>
    %72 = arith.truncf %71 : vector<16x128xf32> to vector<16x128xbf16>
    %cst_38 = arith.constant dense<0.000000e+00> : vector<4x128xf32>
    %73 = tpu.matmul %2, %72, %cst_38 {dimension_numbers = #tpu.dot_dimension_numbers<[1], [0], [0], [1], [0, 0, 1, 1], [], []>} : vector<4x16xbf16>, vector<16x128xbf16>, vector<4x128xf32> -> vector<4x128xf32>
    %c0_39 = arith.constant 0 : index
    %c0_40 = arith.constant 0 : index
    %74 = vector.load %arg11[%c0_39, %c0_40] : memref<128x128xbf16, #tpu.memory_space<vmem>>, vector<128x128xbf16>
    %c0_41 = arith.constant 0 : index
    %c0_42 = arith.constant 0 : index
    %75 = vector.load %arg12[%c0_41, %c0_42] : memref<1x128xf32, #tpu.memory_space<vmem>>, vector<1x128xf32>
    %c0_43 = arith.constant 0 : index
    %c0_44 = arith.constant 0 : index
    %76 = vector.load %arg13[%c0_43, %c0_44] : memref<1x128xf32, #tpu.memory_space<vmem>>, vector<1x128xf32>
    %c0_45 = arith.constant 0 : index
    %c0_46 = arith.constant 0 : index
    %77 = vector.load %arg14[%c0_45, %c0_46] : memref<1x128xf32, #tpu.memory_space<vmem>>, vector<1x128xf32>
    %78 = arith.truncf %73 : vector<4x128xf32> to vector<4x128xbf16>
    %cst_47 = arith.constant dense<0.000000e+00> : vector<4x128xf32>
    %79 = tpu.matmul %78, %74, %cst_47 {dimension_numbers = #tpu.dot_dimension_numbers<[1], [0], [0], [1], [0, 0, 1, 1], [], []>} : vector<4x128xbf16>, vector<128x128xbf16>, vector<4x128xf32> -> vector<4x128xf32>
    %80 = vector.broadcast %75 : vector<1x128xf32> to vector<4x128xf32>
    %81 = arith.addf %79, %80 : vector<4x128xf32>
    %cst_48 = arith.constant 0.000000e+00 : f32
    %82 = vector.broadcast %cst_48 : f32 to vector<4x128xf32>
    %83 = arith.maximumf %81, %82 : vector<4x128xf32>
    %cst_49 = arith.constant dense<0.000000e+00> : vector<128xf32>
    %84 = vector.multi_reduction <add>, %83, %cst_49 [0] : vector<4x128xf32> to vector<128xf32>
    %85 = vector.shape_cast %84 : vector<128xf32> to vector<1x128xf32>
    %cst_50 = arith.constant 4.000000e+00 : f32
    %86 = vector.broadcast %cst_50 : f32 to vector<1x128xf32>
    %87 = arith.divf %85, %86 : vector<1x128xf32>
    %88 = arith.mulf %83, %83 : vector<4x128xf32>
    %cst_51 = arith.constant dense<0.000000e+00> : vector<128xf32>
    %89 = vector.multi_reduction <add>, %88, %cst_51 [0] : vector<4x128xf32> to vector<128xf32>
    %90 = vector.shape_cast %89 : vector<128xf32> to vector<1x128xf32>
    %cst_52 = arith.constant 4.000000e+00 : f32
    %91 = vector.broadcast %cst_52 : f32 to vector<1x128xf32>
    %92 = arith.divf %90, %91 : vector<1x128xf32>
    %93 = arith.mulf %87, %87 : vector<1x128xf32>
    %94 = arith.subf %92, %93 : vector<1x128xf32>
    %cst_53 = arith.constant 0.000000e+00 : f32
    %95 = vector.broadcast %cst_53 : f32 to vector<1x128xf32>
    %96 = arith.maximumf %94, %95 : vector<1x128xf32>
    %cst_54 = arith.constant 9.99999974E-6 : f32
    %97 = vector.broadcast %cst_54 : f32 to vector<1x128xf32>
    %98 = arith.addf %96, %97 : vector<1x128xf32>
    %99 = math.rsqrt %98 : vector<1x128xf32>
    %100 = arith.mulf %76, %99 : vector<1x128xf32>
    %101 = arith.mulf %100, %87 : vector<1x128xf32>
    %102 = arith.subf %77, %101 : vector<1x128xf32>
    %103 = vector.broadcast %100 : vector<1x128xf32> to vector<4x128xf32>
    %104 = arith.mulf %83, %103 : vector<4x128xf32>
    %105 = vector.broadcast %102 : vector<1x128xf32> to vector<4x128xf32>
    %106 = arith.addf %104, %105 : vector<4x128xf32>
    %c0_55 = arith.constant 0 : index
    %c0_56 = arith.constant 0 : index
    %107 = vector.load %arg15[%c0_55, %c0_56] : memref<128x128xbf16, #tpu.memory_space<vmem>>, vector<128x128xbf16>
    %c0_57 = arith.constant 0 : index
    %c0_58 = arith.constant 0 : index
    %108 = vector.load %arg16[%c0_57, %c0_58] : memref<1x128xf32, #tpu.memory_space<vmem>>, vector<1x128xf32>
    %c0_59 = arith.constant 0 : index
    %c0_60 = arith.constant 0 : index
    %109 = vector.load %arg17[%c0_59, %c0_60] : memref<1x128xf32, #tpu.memory_space<vmem>>, vector<1x128xf32>
    %c0_61 = arith.constant 0 : index
    %c0_62 = arith.constant 0 : index
    %110 = vector.load %arg18[%c0_61, %c0_62] : memref<1x128xf32, #tpu.memory_space<vmem>>, vector<1x128xf32>
    %111 = arith.truncf %106 : vector<4x128xf32> to vector<4x128xbf16>
    %cst_63 = arith.constant dense<0.000000e+00> : vector<4x128xf32>
    %112 = tpu.matmul %111, %107, %cst_63 {dimension_numbers = #tpu.dot_dimension_numbers<[1], [0], [0], [1], [0, 0, 1, 1], [], []>} : vector<4x128xbf16>, vector<128x128xbf16>, vector<4x128xf32> -> vector<4x128xf32>
    %113 = vector.broadcast %108 : vector<1x128xf32> to vector<4x128xf32>
    %114 = arith.addf %112, %113 : vector<4x128xf32>
    %cst_64 = arith.constant 0.000000e+00 : f32
    %115 = vector.broadcast %cst_64 : f32 to vector<4x128xf32>
    %116 = arith.maximumf %114, %115 : vector<4x128xf32>
    %cst_65 = arith.constant dense<0.000000e+00> : vector<128xf32>
    %117 = vector.multi_reduction <add>, %116, %cst_65 [0] : vector<4x128xf32> to vector<128xf32>
    %118 = vector.shape_cast %117 : vector<128xf32> to vector<1x128xf32>
    %cst_66 = arith.constant 4.000000e+00 : f32
    %119 = vector.broadcast %cst_66 : f32 to vector<1x128xf32>
    %120 = arith.divf %118, %119 : vector<1x128xf32>
    %121 = arith.mulf %116, %116 : vector<4x128xf32>
    %cst_67 = arith.constant dense<0.000000e+00> : vector<128xf32>
    %122 = vector.multi_reduction <add>, %121, %cst_67 [0] : vector<4x128xf32> to vector<128xf32>
    %123 = vector.shape_cast %122 : vector<128xf32> to vector<1x128xf32>
    %cst_68 = arith.constant 4.000000e+00 : f32
    %124 = vector.broadcast %cst_68 : f32 to vector<1x128xf32>
    %125 = arith.divf %123, %124 : vector<1x128xf32>
    %126 = arith.mulf %120, %120 : vector<1x128xf32>
    %127 = arith.subf %125, %126 : vector<1x128xf32>
    %cst_69 = arith.constant 0.000000e+00 : f32
    %128 = vector.broadcast %cst_69 : f32 to vector<1x128xf32>
    %129 = arith.maximumf %127, %128 : vector<1x128xf32>
    %cst_70 = arith.constant 9.99999974E-6 : f32
    %130 = vector.broadcast %cst_70 : f32 to vector<1x128xf32>
    %131 = arith.addf %129, %130 : vector<1x128xf32>
    %132 = math.rsqrt %131 : vector<1x128xf32>
    %133 = arith.mulf %109, %132 : vector<1x128xf32>
    %134 = arith.mulf %133, %120 : vector<1x128xf32>
    %135 = arith.subf %110, %134 : vector<1x128xf32>
    %136 = vector.broadcast %133 : vector<1x128xf32> to vector<4x128xf32>
    %137 = arith.mulf %116, %136 : vector<4x128xf32>
    %138 = vector.broadcast %135 : vector<1x128xf32> to vector<4x128xf32>
    %139 = arith.addf %137, %138 : vector<4x128xf32>
    %c0_71 = arith.constant 0 : index
    %c0_72 = arith.constant 0 : index
    %140 = vector.load %arg19[%c0_71, %c0_72] : memref<1x128xf32, #tpu.memory_space<vmem>>, vector<1x128xf32>
    %c0_73 = arith.constant 0 : index
    %c0_74 = arith.constant 0 : index
    %141 = vector.load %arg20[%c0_73, %c0_74] : memref<1x1xf32, #tpu.memory_space<vmem>>, vector<1x1xf32>
    %142 = vector.broadcast %140 : vector<1x128xf32> to vector<4x128xf32>
    %143 = arith.mulf %139, %142 : vector<4x128xf32>
    %cst_75 = arith.constant dense<0.000000e+00> : vector<4xf32>
    %144 = vector.multi_reduction <add>, %143, %cst_75 [1] : vector<4x128xf32> to vector<4xf32>
    %145 = vector.shape_cast %144 : vector<4xf32> to vector<4x1xf32>
    %146 = vector.broadcast %141 : vector<1x1xf32> to vector<4x1xf32>
    %147 = arith.addf %145, %146 : vector<4x1xf32>
    %c0_76 = arith.constant 0 : index
    %c0_77 = arith.constant 0 : index
    %148 = vector.load %arg21[%c0_76, %c0_77] : memref<4x1xf32, #tpu.memory_space<vmem>>, vector<4x1xf32>
    tpu.vector_store %arg21[%c0_76, %c0_77], %147 {strides = array<i32>} : memref<4x1xf32, #tpu.memory_space<vmem>>, vector<4x1xf32>,
    return
  }
}

</mosaic_0001>

<llo_original>
// kernel: gcn_forward.1
$region0: #{gcn_forward.1}
  #allocation0 [shape = 'u32[]', space=smem, size = 0x4, offset = 0x4, fixed_abs, tag = 'smem constant byte address 0x4 - core index']
  #allocation1 [shape = 'u32[144,128]{1,0:T(1,128)}', space=vmem, size = 0x12000, scoped, tag = 'internal scratch']
  #allocation2 [shape = 'f32[1,1]{1,0:T(1,128)S(1)}', space=vmem, size = 0x200, scoped, tag = 'scoped memory for gcn_forward.1']
  %s0 = inlined_call_operand.vmem [shape: bf16[16,16], index: 0, kind: input, shape index: {}]
  %s1 = inlined_call_operand.vmem [shape: bf16[16,128], index: 1, kind: input, shape index: {}]
  %s2 = inlined_call_operand.vmem [shape: bf16[4,16], index: 2, kind: input, shape index: {}]
  %s3 = inlined_call_operand.hbm [shape: bf16[128,128], index: 3, kind: input, shape index: {}]
  %s4 = inlined_call_operand.hbm [shape: f32[1,128], index: 4, kind: input, shape index: {}]
  %s5 = inlined_call_operand.hbm [shape: f32[1,128], index: 5, kind: input, shape index: {}]
  %s6 = inlined_call_operand.hbm [shape: f32[1,128], index: 6, kind: input, shape index: {}]
  %s7 = inlined_call_operand.hbm [shape: bf16[128,128], index: 7, kind: input, shape index: {}]
  %s8 = inlined_call_operand.vmem [shape: f32[1,128], index: 8, kind: input, shape index: {}]
  %s9 = inlined_call_operand.vmem [shape: f32[1,128], index: 9, kind: input, shape index: {}]
  %s10 = inlined_call_operand.vmem [shape: f32[1,128], index: 10, kind: input, shape index: {}]
  %s11 = inlined_call_operand.hbm [shape: bf16[128,128], index: 11, kind: input, shape index: {}]
  %s12 = inlined_call_operand.vmem [shape: f32[1,128], index: 12, kind: input, shape index: {}]
  %s13 = inlined_call_operand.vmem [shape: f32[1,128], index: 13, kind: input, shape index: {}]
  %s14 = inlined_call_operand.vmem [shape: f32[1,128], index: 14, kind: input, shape index: {}]
  %s15 = inlined_call_operand.hbm [shape: bf16[128,128], index: 15, kind: input, shape index: {}]
  %s16 = inlined_call_operand.vmem [shape: f32[1,128], index: 16, kind: input, shape index: {}]
  %s17 = inlined_call_operand.vmem [shape: f32[1,128], index: 17, kind: input, shape index: {}]
  %s18 = inlined_call_operand.vmem [shape: f32[1,128], index: 18, kind: input, shape index: {}]
  %s19 = inlined_call_operand.vmem [shape: f32[1,128], index: 19, kind: input, shape index: {}]
  %s20 = inlined_call_operand.<no memory space> [shape: f32[1,1], index: 20, kind: input, shape index: {}]
  %s21 = inlined_call_operand.vmem [shape: f32[4,1], index: 21, kind: output, shape index: {}]
  %s22 = sld [smem:[#allocation0]]
  $region122: #{gcn_forward.1} parent=0
    _
  %s24 = ssub.s32 1, %s22
  %s25 = scalar_select 0, %s24, %s22
  %v26 = vstv %s20
  %27 = vst [vmem:[#allocation2] sm:$0x1] %v26
  $region1: #{gcn_forward.1} parent=0
    #allocation3 [shape = 'u8[32768]{0}', space=vmem, size = 0x8000, scoped, tag = 'input window, operand 3, single buffered']
    #allocation4 [shape = 's32[1]{0}', space=sflag, size = 0x4, scoped, tag = 'scoped memory for gcn_forward.1']
    #allocation5 [shape = 'u8[512]{0}', space=vmem, size = 0x400, scoped, tag = 'input window, operand 4, single buffered']
    #allocation6 [shape = 's32[1]{0}', space=sflag, size = 0x4, scoped, tag = 'scoped memory for gcn_forward.1']
    #allocation7 [shape = 'u8[512]{0}', space=vmem, size = 0x400, scoped, tag = 'input window, operand 5, single buffered']
    #allocation8 [shape = 'u8[512]{0}', space=vmem, size = 0x400, scoped, tag = 'input window, operand 6, single buffered']
    #allocation9 [shape = 's32[1]{0}', space=sflag, size = 0x4, scoped, tag = 'scoped memory for gcn_forward.1']
    #allocation10 [shape = 'u8[32768]{0}', space=vmem, size = 0x8000, scoped, tag = 'input window, operand 7, single buffered']
    #allocation11 [shape = 'u8[32768]{0}', space=vmem, size = 0x8000, scoped, tag = 'input window, operand 11, single buffered']
    #allocation12 [shape = 's32[1]{0}', space=sflag, size = 0x4, scoped, tag = 'scoped memory for gcn_forward.1']
    #allocation13 [shape = 'u8[32768]{0}', space=vmem, size = 0x8000, scoped, tag = 'input window, operand 15, single buffered']
    %28 = vsyncpa [#allocation4], 0
    %29 = vsyncpa [#allocation6], 0
    %30 = vsyncpa [#allocation9], 0
    %31 = vsyncpa [#allocation12], 0
    // Predicated region
    $region2: #{gcn_forward.1} parent=1 // pred_check
      _
    $region3: #{gcn_forward.1} parent=1 // pred_check_branch
      %33 = sbr.rel (0) target = $region5
    $region4: #{gcn_forward.1} parent=1 // pred_region
      _
    $region5: #{gcn_forward.1} parent=1 // pred_fallthru
      _
    // Predicated region
    $region6: #{gcn_forward.1} parent=1 // pred_check
      _
    $region7: #{gcn_forward.1} parent=1 // pred_check_branch
      %35 = sbr.rel (0) target = $region9
    $region8: #{gcn_forward.1} parent=1 // pred_region
      _
    $region9: #{gcn_forward.1} parent=1 // pred_fallthru
      _
    // Predicated region
    $region10: #{gcn_forward.1} parent=1 // pred_check
      _
    $region11: #{gcn_forward.1} parent=1 // pred_check_branch
      %37 = sbr.rel (0) target = $region13
    $region12: #{gcn_forward.1} parent=1 // pred_region
      _
    $region13: #{gcn_forward.1} parent=1 // pred_fallthru
      _
    // Predicated region
    $region14: #{gcn_forward.1} parent=1 // pred_check
      _
    $region15: #{gcn_forward.1} parent=1 // pred_check_branch
      %39 = sbr.rel (0) target = $region17
    $region16: #{gcn_forward.1} parent=1 // pred_region
      %s41 = ssub.s32 1024, 1024
      %42 = vsyncadd [#allocation4], %s41
      %s43 = sshll.u32 [#allocation3], 4
      %s44 = int_to_ptr.vmem [resolvable:$true] %s43
      %49 = dma.hbm_to_vmem [thread:$0]  %s3, 1024, %s44, [#allocation4], 64, 64, 4
    $region17: #{gcn_forward.1} parent=1 // pred_fallthru
      _
    // Predicated region
    $region18: #{gcn_forward.1} parent=1 // pred_check
      _
    $region19: #{gcn_forward.1} parent=1 // pred_check_branch
      %51 = sbr.rel (0) target = $region21
    $region20: #{gcn_forward.1} parent=1 // pred_region
      %s53 = ssub.s32 16, 16
      %54 = vsyncadd [#allocation6], %s53
      %s56 = sshll.u32 [#allocation5], 4
      %s57 = int_to_ptr.vmem [resolvable:$true] %s56
      %59 = dma.hbm_to_vmem [thread:$0]  %s4, 16, %s57, [#allocation6]
    $region21: #{gcn_forward.1} parent=1 // pred_fallthru
      _
    // Predicated region
    $region22: #{gcn_forward.1} parent=1 // pred_check
      _
    $region23: #{gcn_forward.1} parent=1 // pred_check_branch
      %61 = sbr.rel (0) target = $region25
    $region24: #{gcn_forward.1} parent=1 // pred_region
      %s63 = ssub.s32 16, 16
      %64 = vsyncadd [#allocation6], %s63
      %s66 = sshll.u32 [#allocation7], 4
      %s67 = int_to_ptr.vmem [resolvable:$true] %s66
      %69 = dma.hbm_to_vmem [thread:$0]  %s5, 16, %s67, [#allocation6]
    $region25: #{gcn_forward.1} parent=1 // pred_fallthru
      _
    // Predicated region
    $region26: #{gcn_forward.1} parent=1 // pred_check
      _
    $region27: #{gcn_forward.1} parent=1 // pred_check_branch
      %71 = sbr.rel (0) target = $region29
    $region28: #{gcn_forward.1} parent=1 // pred_region
      %s73 = ssub.s32 16, 16
      %74 = vsyncadd [#allocation9], %s73
      %s76 = sshll.u32 [#allocation8], 4
      %s77 = int_to_ptr.vmem [resolvable:$true] %s76
      %79 = dma.hbm_to_vmem [thread:$0]  %s6, 16, %s77, [#allocation9]
    $region29: #{gcn_forward.1} parent=1 // pred_fallthru
      _
    // Predicated region
    $region30: #{gcn_forward.1} parent=1 // pred_check
      _
    $region31: #{gcn_forward.1} parent=1 // pred_check_branch
      %81 = sbr.rel (0) target = $region33
    $region32: #{gcn_forward.1} parent=1 // pred_region
      %s83 = ssub.s32 1024, 1024
      %84 = vsyncadd [#allocation9], %s83
      %s85 = sshll.u32 [#allocation10], 4
      %s86 = int_to_ptr.vmem [resolvable:$true] %s85
      %91 = dma.hbm_to_vmem [thread:$0]  %s7, 1024, %s86, [#allocation9], 64, 64, 4
    $region33: #{gcn_forward.1} parent=1 // pred_fallthru
      _
    // Predicated region
    $region34: #{gcn_forward.1} parent=1 // pred_check
      _
    $region35: #{gcn_forward.1} parent=1 // pred_check_branch
      %93 = sbr.rel (0) target = $region37
    $region36: #{gcn_forward.1} parent=1 // pred_region
      _
    $region37: #{gcn_forward.1} parent=1 // pred_fallthru
      _
    // Predicated region
    $region38: #{gcn_forward.1} parent=1 // pred_check
      _
    $region39: #{gcn_forward.1} parent=1 // pred_check_branch
      %95 = sbr.rel (0) target = $region41
    $region40: #{gcn_forward.1} parent=1 // pred_region
      _
    $region41: #{gcn_forward.1} parent=1 // pred_fallthru
      _
    // Predicated region
    $region42: #{gcn_forward.1} parent=1 // pred_check
      _
    $region43: #{gcn_forward.1} parent=1 // pred_check_branch
      %97 = sbr.rel (0) target = $region45
    $region44: #{gcn_forward.1} parent=1 // pred_region
      _
    $region45: #{gcn_forward.1} parent=1 // pred_fallthru
      _
    // Predicated region
    $region46: #{gcn_forward.1} parent=1 // pred_check
      _
    $region47: #{gcn_forward.1} parent=1 // pred_check_branch
      %99 = sbr.rel (0) target = $region49
    $region48: #{gcn_forward.1} parent=1 // pred_region
      %s101 = ssub.s32 1024, 1024
      %102 = vsyncadd [#allocation12], %s101
      %s103 = sshll.u32 [#allocation11], 4
      %s104 = int_to_ptr.vmem [resolvable:$true] %s103
      %109 = dma.hbm_to_vmem [thread:$0]  %s11, 1024, %s104, [#allocation12], 64, 64, 4
    $region49: #{gcn_forward.1} parent=1 // pred_fallthru
      _
    // Predicated region
    $region50: #{gcn_forward.1} parent=1 // pred_check
      _
    $region51: #{gcn_forward.1} parent=1 // pred_check_branch
      %111 = sbr.rel (0) target = $region53
    $region52: #{gcn_forward.1} parent=1 // pred_region
      _
    $region53: #{gcn_forward.1} parent=1 // pred_fallthru
      _
    // Predicated region
    $region54: #{gcn_forward.1} parent=1 // pred_check
      _
    $region55: #{gcn_forward.1} parent=1 // pred_check_branch
      %113 = sbr.rel (0) target = $region57
    $region56: #{gcn_forward.1} parent=1 // pred_region
      _
    $region57: #{gcn_forward.1} parent=1 // pred_fallthru
      _
    // Predicated region
    $region58: #{gcn_forward.1} parent=1 // pred_check
      _
    $region59: #{gcn_forward.1} parent=1 // pred_check_branch
      %115 = sbr.rel (0) target = $region61
    $region60: #{gcn_forward.1} parent=1 // pred_region
      _
    $region61: #{gcn_forward.1} parent=1 // pred_fallthru
      _
    // Predicated region
    $region62: #{gcn_forward.1} parent=1 // pred_check
      _
    $region63: #{gcn_forward.1} parent=1 // pred_check_branch
      %117 = sbr.rel (0) target = $region65
    $region64: #{gcn_forward.1} parent=1 // pred_region
      %s119 = ssub.s32 1024, 1024
      %120 = vsyncadd [#allocation12], %s119
      %s121 = sshll.u32 [#allocation13], 4
      %s122 = int_to_ptr.vmem [resolvable:$true] %s121
      %127 = dma.hbm_to_vmem [thread:$0]  %s15, 1024, %s122, [#allocation12], 64, 64, 4
    $region65: #{gcn_forward.1} parent=1 // pred_fallthru
      _
    // Predicated region
    $region66: #{gcn_forward.1} parent=1 // pred_check
      _
    $region67: #{gcn_forward.1} parent=1 // pred_check_branch
      %129 = sbr.rel (0) target = $region69
    $region68: #{gcn_forward.1} parent=1 // pred_region
      _
    $region69: #{gcn_forward.1} parent=1 // pred_fallthru
      _
    // Predicated region
    $region70: #{gcn_forward.1} parent=1 // pred_check
      _
    $region71: #{gcn_forward.1} parent=1 // pred_check_branch
      %131 = sbr.rel (0) target = $region73
    $region72: #{gcn_forward.1} parent=1 // pred_region
      _
    $region73: #{gcn_forward.1} parent=1 // pred_fallthru
      _
    // Predicated region
    $region74: #{gcn_forward.1} parent=1 // pred_check
      _
    $region75: #{gcn_forward.1} parent=1 // pred_check_branch
      %133 = sbr.rel (0) target = $region77
    $region76: #{gcn_forward.1} parent=1 // pred_region
      _
    $region77: #{gcn_forward.1} parent=1 // pred_fallthru
      _
    // Predicated region
    $region78: #{gcn_forward.1} parent=1 // pred_check
      _
    $region79: #{gcn_forward.1} parent=1 // pred_check_branch
      %135 = sbr.rel (0) target = $region81
    $region80: #{gcn_forward.1} parent=1 // pred_region
      _
    $region81: #{gcn_forward.1} parent=1 // pred_fallthru
      _
    // Predicated region
    $region82: #{gcn_forward.1} parent=1 // pred_check
      _
    $region83: #{gcn_forward.1} parent=1 // pred_check_branch
      %137 = sbr.rel (0) target = $region85
    $region84: #{gcn_forward.1} parent=1 // pred_region
      _
    $region85: #{gcn_forward.1} parent=1 // pred_fallthru
      _
    // Predicated region
    $region86: #{gcn_forward.1} parent=1 // pred_check
      _
    $region87: #{gcn_forward.1} parent=1 // pred_check_branch
      %139 = sbr.rel (0) target = $region89
    $region88: #{gcn_forward.1} parent=1 // pred_region
      %140 = dma.done [#allocation4], 1024
    $region89: #{gcn_forward.1} parent=1 // pred_fallthru
      _
    // Predicated region
    $region90: #{gcn_forward.1} parent=1 // pred_check
      _
    $region91: #{gcn_forward.1} parent=1 // pred_check_branch
      %142 = sbr.rel (0) target = $region93
    $region92: #{gcn_forward.1} parent=1 // pred_region
      %143 = dma.done [#allocation6], 16
    $region93: #{gcn_forward.1} parent=1 // pred_fallthru
      _
    // Predicated region
    $region94: #{gcn_forward.1} parent=1 // pred_check
      _
    $region95: #{gcn_forward.1} parent=1 // pred_check_branch
      %145 = sbr.rel (0) target = $region97
    $region96: #{gcn_forward.1} parent=1 // pred_region
      %146 = dma.done [#allocation6], 16
    $region97: #{gcn_forward.1} parent=1 // pred_fallthru
      _
    // Predicated region
    $region98: #{gcn_forward.1} parent=1 // pred_check
      _
    $region99: #{gcn_forward.1} parent=1 // pred_check_branch
      %148 = sbr.rel (0) target = $region101
    $region100: #{gcn_forward.1} parent=1 // pred_region
      %149 = dma.done [#allocation9], 16
    $region101: #{gcn_forward.1} parent=1 // pred_fallthru
      _
    // Predicated region
    $region102: #{gcn_forward.1} parent=1 // pred_check
      _
    $region103: #{gcn_forward.1} parent=1 // pred_check_branch
      %151 = sbr.rel (0) target = $region105
    $region104: #{gcn_forward.1} parent=1 // pred_region
      %152 = dma.done [#allocation9], 1024
    $region105: #{gcn_forward.1} parent=1 // pred_fallthru
      _
    // Predicated region
    $region106: #{gcn_forward.1} parent=1 // pred_check
      _
    $region107: #{gcn_forward.1} parent=1 // pred_check_branch
      %154 = sbr.rel (0) target = $region109
    $region108: #{gcn_forward.1} parent=1 // pred_region
      %155 = dma.done [#allocation12], 1024
    $region109: #{gcn_forward.1} parent=1 // pred_fallthru
      _
    // Predicated region
    $region110: #{gcn_forward.1} parent=1 // pred_check
      _
    $region111: #{gcn_forward.1} parent=1 // pred_check_branch
      %157 = sbr.rel (0) target = $region113
    $region112: #{gcn_forward.1} parent=1 // pred_region
      %158 = dma.done [#allocation12], 1024
    $region113: #{gcn_forward.1} parent=1 // pred_fallthru
      _
    %v160 = vld [vmem:[%s0] sm:$0xf]
    %v161 = vld [vmem:[%s0 + $0x4] sm:$0xf]
    %v162 = vld [vmem:[%s1] sm:$0xf]
    %v163 = vld [vmem:[%s1 + $0x4] sm:$0xf]
    %v164 = vld [vmem:[%s2] sm:$0x3]
    %v165 = vld [vmem:[#allocation3] sm:$0xf]
    %v166 = vld [vmem:[#allocation3 + $0x4] sm:$0xf]
    %v167 = vld [vmem:[#allocation3 + $0x8] sm:$0xf]
    %v168 = vld [vmem:[#allocation3 + $0xc] sm:$0xf]
    %v169 = vld [vmem:[#allocation3 + $0x10] sm:$0xf]
    %v170 = vld [vmem:[#allocation3 + $0x14] sm:$0xf]
    %v171 = vld [vmem:[#allocation3 + $0x18] sm:$0xf]
    %v172 = vld [vmem:[#allocation3 + $0x1c] sm:$0xf]
    %v173 = vld [vmem:[#allocation3 + $0x20] sm:$0xf]
    %v174 = vld [vmem:[#allocation3 + $0x24] sm:$0xf]
    %v175 = vld [vmem:[#allocation3 + $0x28] sm:$0xf]
    %v176 = vld [vmem:[#allocation3 + $0x2c] sm:$0xf]
    %v177 = vld [vmem:[#allocation3 + $0x30] sm:$0xf]
    %v178 = vld [vmem:[#allocation3 + $0x34] sm:$0xf]
    %v179 = vld [vmem:[#allocation3 + $0x38] sm:$0xf]
    %v180 = vld [vmem:[#allocation3 + $0x3c] sm:$0xf]
    %v181 = vld [vmem:[#allocation5] sm:$0x1]
    %v182 = vld [vmem:[#allocation7] sm:$0x1]
    %v183 = vld [vmem:[#allocation8] sm:$0x1]
    %v186 = vunpack.c.l.b16 %v160
    %v187 = vunpack.c.l.b16 %v161
    %v188 = vpack.c.b16 %v187, %v186
    %v191 = vunpack.c.l.b16 %v162
    %v192 = vunpack.c.l.b16 %v163
    %v193 = vpack.c.b16 %v192, %v191
    %vm195 = vcmask 130048
    %v197 = vsel %vm195, %v188, 0
    %199 = vmatprep.subr.bf16.mxu0 0
    %200 = vmatpush1.bf16.msra.mxu0 %v193
    %201 = vmatprep.subr.bf16.mxu0 0
    %202 = vmatpush1.bf16.msra.mxu0 0
    %203 = vmatprep.subr.bf16.mxu0 0
    %204 = vmatpush1.bf16.msra.mxu0 0
    %205 = vmatprep.subr.bf16.mxu0 0
    %206 = vmatpush1.bf16.msra.mxu0 0
    %207 = vmatprep.subr.bf16.mxu0 0
    %208 = vmatpush1.bf16.msra.mxu0 0
    %209 = vmatprep.subr.bf16.mxu0 0
    %210 = vmatpush1.bf16.msra.mxu0 0
    %211 = vmatprep.subr.bf16.mxu0 0
    %212 = vmatpush1.bf16.msra.mxu0 0
    %213 = vmatprep.subr.bf16.mxu0 0
    %214 = vmatpush1.bf16.msra.mxu0 0
    %215 = vmatprep.subr.bf16.mxu0 0
    %216 = vmatpush1.bf16.msra.mxu0 0
    %217 = vmatprep.subr.bf16.mxu0 0
    %218 = vmatpush1.bf16.msra.mxu0 0
    %219 = vmatprep.subr.bf16.mxu0 0
    %220 = vmatpush1.bf16.msra.mxu0 0
    %221 = vmatprep.subr.bf16.mxu0 0
    %222 = vmatpush1.bf16.msra.mxu0 0
    %223 = vmatprep.subr.bf16.mxu0 0
    %224 = vmatpush1.bf16.msra.mxu0 0
    %225 = vmatprep.subr.bf16.mxu0 0
    %226 = vmatpush1.bf16.msra.mxu0 0
    %227 = vmatprep.subr.bf16.mxu0 0
    %228 = vmatpush1.bf16.msra.mxu0 0
    %229 = vmatprep.subr.bf16.mxu0 0
    %230 = vmatpush1.bf16.msra.mxu0 0
    %231 = vmatprep.mubr.bf16.mxu0 0
    %232 = vmatmul.mubr.bf16.gmra.mrb[0].mxu0 %v197
    %v233 = vpop.f32.mrb[0].mxu0
    %v234 = vadd.f32 0.0, %v233
    %v235 = vpop.f32.mrb[0].mxu0
    %v236 = vpop.f32.mrb[0].mxu0
    %v237 = vadd.f32 0.0, %v236
    %v238 = vpop.f32.mrb[0].mxu0
    %239 = vdwg.mxu0
    %v240 = vpack.c.bf16 %v237, %v234
    %v242 = vlaneseq
    %v243 = vshrl.u32 %v242, 7
    %v244 = vsub.s32 0, %v243
    %v245 = vrot.slane %v181, %v244
    %v263 = vunpack.c.l.b16 %v165
    %v264 = vunpack.c.l.b16 %v166
    %v265 = vunpack.c.l.b16 %v167
    %v266 = vunpack.c.l.b16 %v168
    %v267 = vunpack.c.l.b16 %v169
    %v268 = vunpack.c.l.b16 %v170
    %v269 = vunpack.c.l.b16 %v171
    %v270 = vunpack.c.l.b16 %v172
    %v271 = vunpack.c.l.b16 %v173
    %v272 = vunpack.c.l.b16 %v174
    %v273 = vunpack.c.l.b16 %v175
    %v274 = vunpack.c.l.b16 %v176
    %v275 = vunpack.c.l.b16 %v177
    %v276 = vunpack.c.l.b16 %v178
    %v277 = vunpack.c.l.b16 %v179
    %v278 = vunpack.c.l.b16 %v180
    %v279 = vpack.c.b16 %v264, %v263
    %v280 = vpack.c.b16 %v266, %v265
    %v281 = vpack.c.b16 %v268, %v267
    %v282 = vpack.c.b16 %v270, %v269
    %v283 = vpack.c.b16 %v272, %v271
    %v284 = vpack.c.b16 %v274, %v273
    %v285 = vpack.c.b16 %v276, %v275
    %v286 = vpack.c.b16 %v278, %v277
    %295 = vmatprep.subr.bf16.mxu0 0
    %296 = vmatpush1.bf16.msra.mxu0 %v279
    %297 = vmatprep.subr.bf16.mxu0 0
    %298 = vmatpush1.bf16.msra.mxu0 %v280
    %299 = vmatprep.subr.bf16.mxu0 0
    %300 = vmatpush1.bf16.msra.mxu0 %v281
    %301 = vmatprep.subr.bf16.mxu0 0
    %302 = vmatpush1.bf16.msra.mxu0 %v282
    %303 = vmatprep.subr.bf16.mxu0 0
    %304 = vmatpush1.bf16.msra.mxu0 %v283
    %305 = vmatprep.subr.bf16.mxu0 0
    %306 = vmatpush1.bf16.msra.mxu0 %v284
    %307 = vmatprep.subr.bf16.mxu0 0
    %308 = vmatpush1.bf16.msra.mxu0 %v285
    %309 = vmatprep.subr.bf16.mxu0 0
    %310 = vmatpush1.bf16.msra.mxu0 %v286
    %311 = vmatprep.subr.bf16.mxu0 0
    %312 = vmatpush1.bf16.msra.mxu0 0
    %313 = vmatprep.subr.bf16.mxu0 0
    %314 = vmatpush1.bf16.msra.mxu0 0
    %315 = vmatprep.subr.bf16.mxu0 0
    %316 = vmatpush1.bf16.msra.mxu0 0
    %317 = vmatprep.subr.bf16.mxu0 0
    %318 = vmatpush1.bf16.msra.mxu0 0
    %319 = vmatprep.subr.bf16.mxu0 0
    %320 = vmatpush1.bf16.msra.mxu0 0
    %321 = vmatprep.subr.bf16.mxu0 0
    %322 = vmatpush1.bf16.msra.mxu0 0
    %323 = vmatprep.subr.bf16.mxu0 0
    %324 = vmatpush1.bf16.msra.mxu0 0
    %325 = vmatprep.subr.bf16.mxu0 0
    %326 = vmatpush1.bf16.msra.mxu0 0
    %327 = vmatprep.mubr.bf16.mxu0 0
    %328 = vmatmul.mubr.bf16.gmra.mrb[0].mxu0 %v240
    %v329 = vpop.f32.mrb[0].mxu0
    %v330 = vadd.f32 %v245, %v329
    %v331 = vpop.f32.mrb[0].mxu0
    %v332 = vpop.f32.mrb[0].mxu0
    %v333 = vadd.f32 %v245, %v332
    %v334 = vpop.f32.mrb[0].mxu0
    %335 = vdwg.mxu0
    %v336 = vmax.f32 %v330, 0.0
    %v337 = vmax.f32 %v333, 0.0
    %v338 = vadd.f32 %v336, %v337
    %v339 = vrot.slane %v338, 4
    %v340 = vadd.f32 %v338, %v339
    %v341 = vrot.slane %v340, 2
    %v342 = vadd.f32 %v340, %v341
    %v343 = vrot.slane %v342, 1
    %v344 = vadd.f32 %v342, %v343
    %v345 = vrcp.pop 16.0
    %v346 = vmul.f32 %v344, %v345
    %v347 = vmul.f32 %v336, %v336
    %v348 = vmul.f32 %v337, %v337
    %v349 = vadd.f32 %v347, %v348
    %v350 = vrot.slane %v349, 4
    %v351 = vadd.f32 %v349, %v350
    %v352 = vrot.slane %v351, 2
    %v353 = vadd.f32 %v351, %v352
    %v354 = vrot.slane %v353, 1
    %v355 = vadd.f32 %v353, %v354
    %v356 = vmul.f32 %v355, %v345
    %v357 = vmul.f32 %v346, %v346
    %v358 = vsub.f32 %v356, %v357
    %v359 = vmax.f32 %v358, 0.0
    %v360 = vadd.f32 %v359, 1e-05
    %v361 = vrsqrt.pop %v360
    %v362 = vmul.f32 %v182, %v361
    %v363 = vmul.f32 %v362, %v346
    %v364 = vsub.f32 %v183, %v363
    %v366 = vlaneseq
    %v367 = vshrl.u32 %v366, 7
    %v368 = vsub.s32 0, %v367
    %v369 = vrot.slane %v362, %v368
    %v371 = vmul.f32 %v336, %v369
    %v372 = vmul.f32 %v337, %v369
    %v374 = vlaneseq
    %v375 = vshrl.u32 %v374, 7
    %v376 = vsub.s32 0, %v375
    %v377 = vrot.slane %v364, %v376
    %v379 = vadd.f32 %v371, %v377
    %v380 = vadd.f32 %v372, %v377
    %v381 = vpack.c.bf16 %v380, %v379
    %v382 = vld [vmem:[#allocation10] sm:$0xf]
    %v383 = vld [vmem:[#allocation10 + $0x4] sm:$0xf]
    %v384 = vld [vmem:[#allocation10 + $0x8] sm:$0xf]
    %v385 = vld [vmem:[#allocation10 + $0xc] sm:$0xf]
    %v386 = vld [vmem:[#allocation10 + $0x10] sm:$0xf]
    %v387 = vld [vmem:[#allocation10 + $0x14] sm:$0xf]
    %v388 = vld [vmem:[#allocation10 + $0x18] sm:$0xf]
    %v389 = vld [vmem:[#allocation10 + $0x1c] sm:$0xf]
    %v390 = vld [vmem:[#allocation10 + $0x20] sm:$0xf]
    %v391 = vld [vmem:[#allocation10 + $0x24] sm:$0xf]
    %v392 = vld [vmem:[#allocation10 + $0x28] sm:$0xf]
    %v393 = vld [vmem:[#allocation10 + $0x2c] sm:$0xf]
    %v394 = vld [vmem:[#allocation10 + $0x30] sm:$0xf]
    %v395 = vld [vmem:[#allocation10 + $0x34] sm:$0xf]
    %v396 = vld [vmem:[#allocation10 + $0x38] sm:$0xf]
    %v397 = vld [vmem:[#allocation10 + $0x3c] sm:$0xf]
    %v398 = vld [vmem:[%s8] sm:$0x1]
    %v399 = vld [vmem:[%s9] sm:$0x1]
    %v400 = vld [vmem:[%s10] sm:$0x1]
    %401 = vmatprep.subr.bf16.mxu0 0
    %402 = vmatpush1.bf16.msra.mxu0 %v381
    %403 = vmatprep.subr.bf16.mxu0 0
    %404 = vmatpush1.bf16.msra.mxu0 0
    %405 = vmatprep.subr.bf16.mxu0 0
    %406 = vmatpush1.bf16.msra.mxu0 0
    %407 = vmatprep.subr.bf16.mxu0 0
    %408 = vmatpush1.bf16.msra.mxu0 0
    %409 = vmatprep.subr.bf16.mxu0 0
    %410 = vmatpush1.bf16.msra.mxu0 0
    %411 = vmatprep.subr.bf16.mxu0 0
    %412 = vmatpush1.bf16.msra.mxu0 0
    %413 = vmatprep.subr.bf16.mxu0 0
    %414 = vmatpush1.bf16.msra.mxu0 0
    %415 = vmatprep.subr.bf16.mxu0 0
    %416 = vmatpush1.bf16.msra.mxu0 0
    %417 = vmatprep.subr.bf16.mxu0 0
    %418 = vmatpush1.bf16.msra.mxu0 0
    %419 = vmatprep.subr.bf16.mxu0 0
    %420 = vmatpush1.bf16.msra.mxu0 0
    %421 = vmatprep.subr.bf16.mxu0 0
    %422 = vmatpush1.bf16.msra.mxu0 0
    %423 = vmatprep.subr.bf16.mxu0 0
    %424 = vmatpush1.bf16.msra.mxu0 0
    %425 = vmatprep.subr.bf16.mxu0 0
    %426 = vmatpush1.bf16.msra.mxu0 0
    %427 = vmatprep.subr.bf16.mxu0 0
    %428 = vmatpush1.bf16.msra.mxu0 0
    %429 = vmatprep.subr.bf16.mxu0 0
    %430 = vmatpush1.bf16.msra.mxu0 0
    %431 = vmatprep.subr.bf16.mxu0 0
    %432 = vmatpush1.bf16.msra.mxu0 0
    %433 = vmatprep.mubr.bf16.mxu0 0
    %434 = vmatmul.mubr.bf16.gmra.mrb[0].mxu0 %v197
    %v435 = vpop.f32.mrb[0].mxu0
    %v436 = vadd.f32 0.0, %v435
    %v437 = vpop.f32.mrb[0].mxu0
    %v438 = vpop.f32.mrb[0].mxu0
    %v439 = vadd.f32 0.0, %v438
    %v440 = vpop.f32.mrb[0].mxu0
    %441 = vdwg.mxu0
    %v442 = vpack.c.bf16 %v439, %v436
    %v444 = vlaneseq
    %v445 = vshrl.u32 %v444, 7
    %v446 = vsub.s32 0, %v445
    %v447 = vrot.slane %v398, %v446
    %v465 = vunpack.c.l.b16 %v382
    %v466 = vunpack.c.l.b16 %v383
    %v467 = vunpack.c.l.b16 %v384
    %v468 = vunpack.c.l.b16 %v385
    %v469 = vunpack.c.l.b16 %v386
    %v470 = vunpack.c.l.b16 %v387
    %v471 = vunpack.c.l.b16 %v388
    %v472 = vunpack.c.l.b16 %v389
    %v473 = vunpack.c.l.b16 %v390
    %v474 = vunpack.c.l.b16 %v391
    %v475 = vunpack.c.l.b16 %v392
    %v476 = vunpack.c.l.b16 %v393
    %v477 = vunpack.c.l.b16 %v394
    %v478 = vunpack.c.l.b16 %v395
    %v479 = vunpack.c.l.b16 %v396
    %v480 = vunpack.c.l.b16 %v397
    %v481 = vpack.c.b16 %v466, %v465
    %v482 = vpack.c.b16 %v468, %v467
    %v483 = vpack.c.b16 %v470, %v469
    %v484 = vpack.c.b16 %v472, %v471
    %v485 = vpack.c.b16 %v474, %v473
    %v486 = vpack.c.b16 %v476, %v475
    %v487 = vpack.c.b16 %v478, %v477
    %v488 = vpack.c.b16 %v480, %v479
    %497 = vmatprep.subr.bf16.mxu0 0
    %498 = vmatpush1.bf16.msra.mxu0 %v481
    %499 = vmatprep.subr.bf16.mxu0 0
    %500 = vmatpush1.bf16.msra.mxu0 %v482
    %501 = vmatprep.subr.bf16.mxu0 0
    %502 = vmatpush1.bf16.msra.mxu0 %v483
    %503 = vmatprep.subr.bf16.mxu0 0
    %504 = vmatpush1.bf16.msra.mxu0 %v484
    %505 = vmatprep.subr.bf16.mxu0 0
    %506 = vmatpush1.bf16.msra.mxu0 %v485
    %507 = vmatprep.subr.bf16.mxu0 0
    %508 = vmatpush1.bf16.msra.mxu0 %v486
    %509 = vmatprep.subr.bf16.mxu0 0
    %510 = vmatpush1.bf16.msra.mxu0 %v487
    %511 = vmatprep.subr.bf16.mxu0 0
    %512 = vmatpush1.bf16.msra.mxu0 %v488
    %513 = vmatprep.subr.bf16.mxu0 0
    %514 = vmatpush1.bf16.msra.mxu0 0
    %515 = vmatprep.subr.bf16.mxu0 0
    %516 = vmatpush1.bf16.msra.mxu0 0
    %517 = vmatprep.subr.bf16.mxu0 0
    %518 = vmatpush1.bf16.msra.mxu0 0
    %519 = vmatprep.subr.bf16.mxu0 0
    %520 = vmatpush1.bf16.msra.mxu0 0
    %521 = vmatprep.subr.bf16.mxu0 0
    %522 = vmatpush1.bf16.msra.mxu0 0
    %523 = vmatprep.subr.bf16.mxu0 0
    %524 = vmatpush1.bf16.msra.mxu0 0
    %525 = vmatprep.subr.bf16.mxu0 0
    %526 = vmatpush1.bf16.msra.mxu0 0
    %527 = vmatprep.subr.bf16.mxu0 0
    %528 = vmatpush1.bf16.msra.mxu0 0
    %529 = vmatprep.mubr.bf16.mxu0 0
    %530 = vmatmul.mubr.bf16.gmra.mrb[0].mxu0 %v442
    %v531 = vpop.f32.mrb[0].mxu0
    %v532 = vadd.f32 %v447, %v531
    %v533 = vpop.f32.mrb[0].mxu0
    %v534 = vpop.f32.mrb[0].mxu0
    %v535 = vadd.f32 %v447, %v534
    %v536 = vpop.f32.mrb[0].mxu0
    %537 = vdwg.mxu0
    %v538 = vmax.f32 %v532, 0.0
    %v539 = vmax.f32 %v535, 0.0
    %v540 = vadd.f32 %v538, %v539
    %v541 = vrot.slane %v540, 4
    %v542 = vadd.f32 %v540, %v541
    %v543 = vrot.slane %v542, 2
    %v544 = vadd.f32 %v542, %v543
    %v545 = vrot.slane %v544, 1
    %v546 = vadd.f32 %v544, %v545
    %v547 = vmul.f32 %v546, %v345
    %v548 = vmul.f32 %v538, %v538
    %v549 = vmul.f32 %v539, %v539
    %v550 = vadd.f32 %v548, %v549
    %v551 = vrot.slane %v550, 4
    %v552 = vadd.f32 %v550, %v551
    %v553 = vrot.slane %v552, 2
    %v554 = vadd.f32 %v552, %v553
    %v555 = vrot.slane %v554, 1
    %v556 = vadd.f32 %v554, %v555
    %v557 = vmul.f32 %v556, %v345
    %v558 = vmul.f32 %v547, %v547
    %v559 = vsub.f32 %v557, %v558
    %v560 = vmax.f32 %v559, 0.0
    %v561 = vadd.f32 %v560, 1e-05
    %v562 = vrsqrt.pop %v561
    %v563 = vmul.f32 %v399, %v562
    %v564 = vmul.f32 %v563, %v547
    %v565 = vsub.f32 %v400, %v564
    %v567 = vlaneseq
    %v568 = vshrl.u32 %v567, 7
    %v569 = vsub.s32 0, %v568
    %v570 = vrot.slane %v563, %v569
    %v572 = vmul.f32 %v538, %v570
    %v573 = vmul.f32 %v539, %v570
    %v575 = vlaneseq
    %v576 = vshrl.u32 %v575, 7
    %v577 = vsub.s32 0, %v576
    %v578 = vrot.slane %v565, %v577
    %v580 = vadd.f32 %v572, %v578
    %v581 = vadd.f32 %v573, %v578
    %v582 = vpack.c.bf16 %v581, %v580
    %v584 = vsel %vm195, %v164, 0
    %586 = vmatprep.subr.bf16.mxu0 0
    %587 = vmatpush1.bf16.msra.mxu0 %v582
    %588 = vmatprep.subr.bf16.mxu0 0
    %589 = vmatpush1.bf16.msra.mxu0 0
    %590 = vmatprep.subr.bf16.mxu0 0
    %591 = vmatpush1.bf16.msra.mxu0 0
    %592 = vmatprep.subr.bf16.mxu0 0
    %593 = vmatpush1.bf16.msra.mxu0 0
    %594 = vmatprep.subr.bf16.mxu0 0
    %595 = vmatpush1.bf16.msra.mxu0 0
    %596 = vmatprep.subr.bf16.mxu0 0
    %597 = vmatpush1.bf16.msra.mxu0 0
    %598 = vmatprep.subr.bf16.mxu0 0
    %599 = vmatpush1.bf16.msra.mxu0 0
    %600 = vmatprep.subr.bf16.mxu0 0
    %601 = vmatpush1.bf16.msra.mxu0 0
    %602 = vmatprep.subr.bf16.mxu0 0
    %603 = vmatpush1.bf16.msra.mxu0 0
    %604 = vmatprep.subr.bf16.mxu0 0
    %605 = vmatpush1.bf16.msra.mxu0 0
    %606 = vmatprep.subr.bf16.mxu0 0
    %607 = vmatpush1.bf16.msra.mxu0 0
    %608 = vmatprep.subr.bf16.mxu0 0
    %609 = vmatpush1.bf16.msra.mxu0 0
    %610 = vmatprep.subr.bf16.mxu0 0
    %611 = vmatpush1.bf16.msra.mxu0 0
    %612 = vmatprep.subr.bf16.mxu0 0
    %613 = vmatpush1.bf16.msra.mxu0 0
    %614 = vmatprep.subr.bf16.mxu0 0
    %615 = vmatpush1.bf16.msra.mxu0 0
    %616 = vmatprep.subr.bf16.mxu0 0
    %617 = vmatpush1.bf16.msra.mxu0 0
    %618 = vmatprep.mubr.bf16.mxu0 0
    %619 = vmatmul.mubr.bf16.gmra.mrb[0].mxu0 %v584
    %v620 = vpop.f32.mrb[0].mxu0
    %v621 = vadd.f32 0.0, %v620
    %v622 = vpop.f32.mrb[0].mxu0
    %v623 = vpop.f32.mrb[0].mxu0
    %v624 = vpop.f32.mrb[0].mxu0
    %625 = vdwg.mxu0
    %v626 = vld [vmem:[#allocation11] sm:$0xf]
    %v627 = vld [vmem:[#allocation11 + $0x4] sm:$0xf]
    %v628 = vld [vmem:[#allocation11 + $0x8] sm:$0xf]
    %v629 = vld [vmem:[#allocation11 + $0xc] sm:$0xf]
    %v630 = vld [vmem:[#allocation11 + $0x10] sm:$0xf]
    %v631 = vld [vmem:[#allocation11 + $0x14] sm:$0xf]
    %v632 = vld [vmem:[#allocation11 + $0x18] sm:$0xf]
    %v633 = vld [vmem:[#allocation11 + $0x1c] sm:$0xf]
    %v634 = vld [vmem:[#allocation11 + $0x20] sm:$0xf]
    %v635 = vld [vmem:[#allocation11 + $0x24] sm:$0xf]
    %v636 = vld [vmem:[#allocation11 + $0x28] sm:$0xf]
    %v637 = vld [vmem:[#allocation11 + $0x2c] sm:$0xf]
    %v638 = vld [vmem:[#allocation11 + $0x30] sm:$0xf]
    %v639 = vld [vmem:[#allocation11 + $0x34] sm:$0xf]
    %v640 = vld [vmem:[#allocation11 + $0x38] sm:$0xf]
    %v641 = vld [vmem:[#allocation11 + $0x3c] sm:$0xf]
    %v642 = vld [vmem:[%s12] sm:$0x1]
    %v643 = vld [vmem:[%s13] sm:$0x1]
    %v644 = vld [vmem:[%s14] sm:$0x1]
    %v645 = vpack.c.bf16 %v621, %v621
    %v647 = vlaneseq
    %v648 = vshrl.u32 %v647, 7
    %v649 = vsub.s32 0, %v648
    %v650 = vrot.slane %v642, %v649
    %v668 = vunpack.c.l.b16 %v626
    %v669 = vunpack.c.l.b16 %v627
    %v670 = vunpack.c.l.b16 %v628
    %v671 = vunpack.c.l.b16 %v629
    %v672 = vunpack.c.l.b16 %v630
    %v673 = vunpack.c.l.b16 %v631
    %v674 = vunpack.c.l.b16 %v632
    %v675 = vunpack.c.l.b16 %v633
    %v676 = vunpack.c.l.b16 %v634
    %v677 = vunpack.c.l.b16 %v635
    %v678 = vunpack.c.l.b16 %v636
    %v679 = vunpack.c.l.b16 %v637
    %v680 = vunpack.c.l.b16 %v638
    %v681 = vunpack.c.l.b16 %v639
    %v682 = vunpack.c.l.b16 %v640
    %v683 = vunpack.c.l.b16 %v641
    %v684 = vpack.c.b16 %v669, %v668
    %v685 = vpack.c.b16 %v671, %v670
    %v686 = vpack.c.b16 %v673, %v672
    %v687 = vpack.c.b16 %v675, %v674
    %v688 = vpack.c.b16 %v677, %v676
    %v689 = vpack.c.b16 %v679, %v678
    %v690 = vpack.c.b16 %v681, %v680
    %v691 = vpack.c.b16 %v683, %v682
    %700 = vmatprep.subr.bf16.mxu0 0
    %701 = vmatpush1.bf16.msra.mxu0 %v684
    %702 = vmatprep.subr.bf16.mxu0 0
    %703 = vmatpush1.bf16.msra.mxu0 %v685
    %704 = vmatprep.subr.bf16.mxu0 0
    %705 = vmatpush1.bf16.msra.mxu0 %v686
    %706 = vmatprep.subr.bf16.mxu0 0
    %707 = vmatpush1.bf16.msra.mxu0 %v687
    %708 = vmatprep.subr.bf16.mxu0 0
    %709 = vmatpush1.bf16.msra.mxu0 %v688
    %710 = vmatprep.subr.bf16.mxu0 0
    %711 = vmatpush1.bf16.msra.mxu0 %v689
    %712 = vmatprep.subr.bf16.mxu0 0
    %713 = vmatpush1.bf16.msra.mxu0 %v690
    %714 = vmatprep.subr.bf16.mxu0 0
    %715 = vmatpush1.bf16.msra.mxu0 %v691
    %716 = vmatprep.subr.bf16.mxu0 0
    %717 = vmatpush1.bf16.msra.mxu0 0
    %718 = vmatprep.subr.bf16.mxu0 0
    %719 = vmatpush1.bf16.msra.mxu0 0
    %720 = vmatprep.subr.bf16.mxu0 0
    %721 = vmatpush1.bf16.msra.mxu0 0
    %722 = vmatprep.subr.bf16.mxu0 0
    %723 = vmatpush1.bf16.msra.mxu0 0
    %724 = vmatprep.subr.bf16.mxu0 0
    %725 = vmatpush1.bf16.msra.mxu0 0
    %726 = vmatprep.subr.bf16.mxu0 0
    %727 = vmatpush1.bf16.msra.mxu0 0
    %728 = vmatprep.subr.bf16.mxu0 0
    %729 = vmatpush1.bf16.msra.mxu0 0
    %730 = vmatprep.subr.bf16.mxu0 0
    %731 = vmatpush1.bf16.msra.mxu0 0
    %732 = vmatprep.mubr.bf16.mxu0 0
    %733 = vmatmul.mubr.bf16.gmra.mrb[0].mxu0 %v645
    %v734 = vpop.f32.mrb[0].mxu0
    %v735 = vadd.f32 %v650, %v734
    %v736 = vpop.f32.mrb[0].mxu0
    %v737 = vpop.f32.mrb[0].mxu0
    %v738 = vpop.f32.mrb[0].mxu0
    %739 = vdwg.mxu0
    %v740 = vmax.f32 %v735, 0.0
    %vm741 = vcmask 1043456
    %v742 = vsel %vm741, %v740, 0.0
    %v743 = vrot.slane %v742, 4
    %v744 = vadd.f32 %v742, %v743
    %v745 = vrot.slane %v744, 2
    %v746 = vadd.f32 %v744, %v745
    %v747 = vrot.slane %v746, 1
    %v748 = vadd.f32 %v746, %v747
    %v749 = vrcp.pop 4.0
    %v750 = vmul.f32 %v748, %v749
    %v751 = vmul.f32 %v740, %v740
    %v752 = vsel %vm741, %v751, 0.0
    %v753 = vrot.slane %v752, 4
    %v754 = vadd.f32 %v752, %v753
    %v755 = vrot.slane %v754, 2
    %v756 = vadd.f32 %v754, %v755
    %v757 = vrot.slane %v756, 1
    %v758 = vadd.f32 %v756, %v757
    %v759 = vmul.f32 %v758, %v749
    %v760 = vmul.f32 %v750, %v750
    %v761 = vsub.f32 %v759, %v760
    %v762 = vmax.f32 %v761, 0.0
    %v763 = vadd.f32 %v762, 1e-05
    %v764 = vrsqrt.pop %v763
    %v765 = vmul.f32 %v643, %v764
    %v766 = vmul.f32 %v765, %v750
    %v767 = vsub.f32 %v644, %v766
    %v769 = vlaneseq
    %v770 = vshrl.u32 %v769, 7
    %v771 = vsub.s32 0, %v770
    %v772 = vrot.slane %v765, %v771
    %v774 = vmul.f32 %v740, %v772
    %v776 = vlaneseq
    %v777 = vshrl.u32 %v776, 7
    %v778 = vsub.s32 0, %v777
    %v779 = vrot.slane %v767, %v778
    %v781 = vadd.f32 %v774, %v779
    %v782 = vld [vmem:[#allocation13] sm:$0xf]
    %v783 = vld [vmem:[#allocation13 + $0x4] sm:$0xf]
    %v784 = vld [vmem:[#allocation13 + $0x8] sm:$0xf]
    %v785 = vld [vmem:[#allocation13 + $0xc] sm:$0xf]
    %v786 = vld [vmem:[#allocation13 + $0x10] sm:$0xf]
    %v787 = vld [vmem:[#allocation13 + $0x14] sm:$0xf]
    %v788 = vld [vmem:[#allocation13 + $0x18] sm:$0xf]
    %v789 = vld [vmem:[#allocation13 + $0x1c] sm:$0xf]
    %v790 = vld [vmem:[#allocation13 + $0x20] sm:$0xf]
    %v791 = vld [vmem:[#allocation13 + $0x24] sm:$0xf]
    %v792 = vld [vmem:[#allocation13 + $0x28] sm:$0xf]
    %v793 = vld [vmem:[#allocation13 + $0x2c] sm:$0xf]
    %v794 = vld [vmem:[#allocation13 + $0x30] sm:$0xf]
    %v795 = vld [vmem:[#allocation13 + $0x34] sm:$0xf]
    %v796 = vld [vmem:[#allocation13 + $0x38] sm:$0xf]
    %v797 = vld [vmem:[#allocation13 + $0x3c] sm:$0xf]
    %v798 = vld [vmem:[%s16] sm:$0x1]
    %v799 = vld [vmem:[%s17] sm:$0x1]
    %v800 = vld [vmem:[%s18] sm:$0x1]
    %v801 = vpack.c.bf16 %v781, %v781
    %v803 = vlaneseq
    %v804 = vshrl.u32 %v803, 7
    %v805 = vsub.s32 0, %v804
    %v806 = vrot.slane %v798, %v805
    %v824 = vunpack.c.l.b16 %v782
    %v825 = vunpack.c.l.b16 %v783
    %v826 = vunpack.c.l.b16 %v784
    %v827 = vunpack.c.l.b16 %v785
    %v828 = vunpack.c.l.b16 %v786
    %v829 = vunpack.c.l.b16 %v787
    %v830 = vunpack.c.l.b16 %v788
    %v831 = vunpack.c.l.b16 %v789
    %v832 = vunpack.c.l.b16 %v790
    %v833 = vunpack.c.l.b16 %v791
    %v834 = vunpack.c.l.b16 %v792
    %v835 = vunpack.c.l.b16 %v793
    %v836 = vunpack.c.l.b16 %v794
    %v837 = vunpack.c.l.b16 %v795
    %v838 = vunpack.c.l.b16 %v796
    %v839 = vunpack.c.l.b16 %v797
    %v840 = vpack.c.b16 %v825, %v824
    %v841 = vpack.c.b16 %v827, %v826
    %v842 = vpack.c.b16 %v829, %v828
    %v843 = vpack.c.b16 %v831, %v830
    %v844 = vpack.c.b16 %v833, %v832
    %v845 = vpack.c.b16 %v835, %v834
    %v846 = vpack.c.b16 %v837, %v836
    %v847 = vpack.c.b16 %v839, %v838
    %856 = vmatprep.subr.bf16.mxu0 0
    %857 = vmatpush1.bf16.msra.mxu0 %v840
    %858 = vmatprep.subr.bf16.mxu0 0
    %859 = vmatpush1.bf16.msra.mxu0 %v841
    %860 = vmatprep.subr.bf16.mxu0 0
    %861 = vmatpush1.bf16.msra.mxu0 %v842
    %862 = vmatprep.subr.bf16.mxu0 0
    %863 = vmatpush1.bf16.msra.mxu0 %v843
    %864 = vmatprep.subr.bf16.mxu0 0
    %865 = vmatpush1.bf16.msra.mxu0 %v844
    %866 = vmatprep.subr.bf16.mxu0 0
    %867 = vmatpush1.bf16.msra.mxu0 %v845
    %868 = vmatprep.subr.bf16.mxu0 0
    %869 = vmatpush1.bf16.msra.mxu0 %v846
    %870 = vmatprep.subr.bf16.mxu0 0
    %871 = vmatpush1.bf16.msra.mxu0 %v847
    %872 = vmatprep.subr.bf16.mxu0 0
    %873 = vmatpush1.bf16.msra.mxu0 0
    %874 = vmatprep.subr.bf16.mxu0 0
    %875 = vmatpush1.bf16.msra.mxu0 0
    %876 = vmatprep.subr.bf16.mxu0 0
    %877 = vmatpush1.bf16.msra.mxu0 0
    %878 = vmatprep.subr.bf16.mxu0 0
    %879 = vmatpush1.bf16.msra.mxu0 0
    %880 = vmatprep.subr.bf16.mxu0 0
    %881 = vmatpush1.bf16.msra.mxu0 0
    %882 = vmatprep.subr.bf16.mxu0 0
    %883 = vmatpush1.bf16.msra.mxu0 0
    %884 = vmatprep.subr.bf16.mxu0 0
    %885 = vmatpush1.bf16.msra.mxu0 0
    %886 = vmatprep.subr.bf16.mxu0 0
    %887 = vmatpush1.bf16.msra.mxu0 0
    %888 = vmatprep.mubr.bf16.mxu0 0
    %889 = vmatmul.mubr.bf16.gmra.mrb[0].mxu0 %v801
    %v890 = vpop.f32.mrb[0].mxu0
    %v891 = vadd.f32 %v806, %v890
    %v892 = vpop.f32.mrb[0].mxu0
    %v893 = vpop.f32.mrb[0].mxu0
    %v894 = vpop.f32.mrb[0].mxu0
    %895 = vdwg.mxu0
    %v896 = vmax.f32 %v891, 0.0
    %v897 = vsel %vm741, %v896, 0.0
    %v898 = vrot.slane %v897, 4
    %v899 = vadd.f32 %v897, %v898
    %v900 = vrot.slane %v899, 2
    %v901 = vadd.f32 %v899, %v900
    %v902 = vrot.slane %v901, 1
    %v903 = vadd.f32 %v901, %v902
    %v904 = vmul.f32 %v903, %v749
    %v905 = vmul.f32 %v896, %v896
    %v906 = vsel %vm741, %v905, 0.0
    %v907 = vrot.slane %v906, 4
    %v908 = vadd.f32 %v906, %v907
    %v909 = vrot.slane %v908, 2
    %v910 = vadd.f32 %v908, %v909
    %v911 = vrot.slane %v910, 1
    %v912 = vadd.f32 %v910, %v911
    %v913 = vmul.f32 %v912, %v749
    %v914 = vmul.f32 %v904, %v904
    %v915 = vsub.f32 %v913, %v914
    %v916 = vmax.f32 %v915, 0.0
    %v917 = vadd.f32 %v916, 1e-05
    %v918 = vrsqrt.pop %v917
    %v919 = vmul.f32 %v799, %v918
    %v920 = vmul.f32 %v919, %v904
    %v921 = vsub.f32 %v800, %v920
    %v923 = vlaneseq
    %v924 = vshrl.u32 %v923, 7
    %v925 = vsub.s32 0, %v924
    %v926 = vrot.slane %v919, %v925
    %v928 = vmul.f32 %v896, %v926
    %v930 = vlaneseq
    %v931 = vshrl.u32 %v930, 7
    %v932 = vsub.s32 0, %v931
    %v933 = vrot.slane %v921, %v932
    %v935 = vadd.f32 %v928, %v933
    %v936 = vld [vmem:[%s19] sm:$0x1]
    %v937 = vld [vmem:[#allocation2] sm:$0x1]
    %v939 = vlaneseq
    %v940 = vshrl.u32 %v939, 7
    %v941 = vsub.s32 0, %v940
    %v942 = vrot.slane %v936, %v941
    %v944 = vmul.f32 %v935, %v942
    %v945 = vsel %vm741, %v944, 0.0
    %946 = vadd.xlane.f32.xlu0 %v945
    %v947 = vpop.xlane.xlu0 %946
    %v949 = vlaneseq
    %v950 = vshrl.u32 %v949, 7
    %v951 = vsub.s32 0, %v950
    %v952 = vrot.slane %v937, %v951
    %v954 = vadd.f32 %v947, %v952
    %vm955 = vcmask 3072
    %956 = vst.msk [vmem:[%s21] sm:$0xf] %vm955, %v954
    // Predicated region
    $region114: #{gcn_forward.1} parent=1 // pred_check
      _
    $region115: #{gcn_forward.1} parent=1 // pred_check_branch
      %958 = sbr.rel (0) target = $region117
    $region116: #{gcn_forward.1} parent=1 // pred_region
      _
    $region117: #{gcn_forward.1} parent=1 // pred_fallthru
      _
    // Predicated region
    $region118: #{gcn_forward.1} parent=1 // pred_check
      _
    $region119: #{gcn_forward.1} parent=1 // pred_check_branch
      %960 = sbr.rel (0) target = $region121
    $region120: #{gcn_forward.1} parent=1 // pred_region
      _
    $region121: #{gcn_forward.1} parent=1 // pred_fallthru
      _
    %961 = vsyncpa [#allocation4], 1
    %962 = vsyncpa [#allocation6], 1
    %963 = vsyncpa [#allocation9], 1
    %964 = vsyncpa [#allocation12], 1

</llo_original>
